<compile_context>
chip_gen: v7x
topology: tpu7x:2x2x1
jax: 0.10.0
libtpu: 0.0.40
codegen_flags: <defaults>
</compile_context>

<pallas_src>
import jax
import jax.numpy as jnp
from jax.experimental import pallas as pl
from jax.experimental.pallas import tpu as pltpu


def autopad(kernel_size, padding=None, dilation=1):
    if dilation > 1:
        kernel_size = dilation * (kernel_size - 1) + 1
    if padding is None:
        padding = kernel_size // 2
    return padding


def _round_up(x, m):
    return (x + m - 1) // m * m


# -----------------------------------------------------------------------------
# Pallas kernel: fused 3x3 conv (dilation d) + folded BatchNorm + ReLU
# -----------------------------------------------------------------------------
def _make_kernel(Cin, Cout, Wp, Lpad, d):
    # Lane offsets of the 9 conv taps inside a flattened padded row-slab.
    offs = [(kh * d) * Wp + (kw * d) for kh in range(3) for kw in range(3)]
    K = 9 * Cin

    def kernel(x_ref, w_ref, shift_ref, o_ref, stage_ref):
        # x_ref:     (Cin, SLAB)    bf16  row slab incl. halo, lane-dense flattened
        # w_ref:     (Cout, 9*Cin)  bf16  BN-folded weights, taps stacked on K
        # shift_ref: (Cout, 1)      f32   folded BN shift (includes conv bias)
        # o_ref:     (Cout, Lpad)   f32   one output row tile, lanes padded to 128
        # stage_ref: (9*Cin, Lpad)  bf16  staging for the fused contraction
        for t, off in enumerate(offs):          # static, contiguous lane-offset slices
            stage_ref[t * Cin:(t + 1) * Cin, :] = x_ref[:, off:off + Lpad]
        # Single fused K = 9*Cin MXU contraction with f32 accumulation.
        acc = jnp.dot(w_ref[...], stage_ref[...],
                      preferred_element_type=jnp.float32)
        # Folded-BN shift + ReLU epilogue (all f32).
        o_ref[...] = jnp.maximum(acc + shift_ref[...], 0.0)

    return kernel, K


def conv_norm_act(x_nchw, params, dilation=1, row_tile=8):
    """Fused Conv2d(3x3, padding=autopad, dilation) + BatchNorm2d(eval) + ReLU.

    x_nchw: (N, Cin, H, W) float32.  Returns (N, Cout, H, W) float32 (NCHW).
    """
    w, b, gamma, beta, mean, var = params
    Cout, Cin, KH, KW = w.shape
    assert (KH, KW) == (3, 3), "specialised for the 3x3 convs used by U^2-Net"
    N, Cin_x, H, W = x_nchw.shape
    assert Cin_x == Cin

    d = dilation
    p = autopad(3, None, d)                 # == d for 3x3 kernels
    Hp, Wp = H + 2 * p, W + 2 * p

    if row_tile is None or H % row_tile != 0:
        row_tile = H
    TH = row_tile
    R = H // TH
    Ltile = TH * Wp                          # valid output lanes per row tile
    Lpad = _round_up(Ltile, 128)             # lane-dense, unmasked stores
    halo = 2 * d * Wp + 2 * d                # furthest tap offset
    SLAB = halo + Lpad                       # input lanes needed per row tile

    # bf16 first, then pad (half the pre-kernel pad traffic of f32-pad + cast).
    xp = jnp.pad(x_nchw.astype(jnp.bfloat16), ((0, 0), (0, 0), (p, p), (p, p)))
    Lflat = (H - TH) * Wp + SLAB             # enough trailing zeros for the last slab
    xf = jnp.pad(xp.reshape(N, Cin, Hp * Wp), ((0, 0), (0, 0), (0, Lflat - Hp * Wp)))
    # Row slabs (with halo) so every in-kernel tap slice is static and in bounds
    # (VMEM reads are not bounds-checked).
    xs = jnp.stack([xf[:, :, r * Ltile:r * Ltile + SLAB] for r in range(R)], axis=1)
    # xs: (N, R, Cin, SLAB)

    # Fold BatchNorm (eval mode) into the conv weights + per-channel f32 shift.
    eps = 1e-5
    scale = gamma / jnp.sqrt(var + eps)                              # (Cout,)
    w_folded = w * scale[:, None, None, None]                        # (Cout, Cin, 3, 3)
    wt = (jnp.transpose(w_folded, (0, 2, 3, 1))                      # (Cout, 3, 3, Cin)
          .reshape(Cout, 9 * Cin).astype(jnp.bfloat16))
    shift = ((b - mean) * scale + beta).reshape(Cout, 1).astype(jnp.float32)

    kernel, K = _make_kernel(Cin, Cout, Wp, Lpad, d)

    # VMEM budget: double-buffered input slab + output tile, resident weights,
    # staging scratch.  Cap at 64 MiB (v7x physical VMEM).
    vmem_bytes = (2 * Cin * SLAB * 2 + 2 * Cout * Lpad * 4
                  + 2 * Cout * K * 2 + 2 * Cout * 4 + K * Lpad * 2)
    vmem_limit = max(4 << 20, min(64 << 20, 2 * vmem_bytes + (1 << 20)))

    out_flat = pl.pallas_call(
        kernel,
        out_shape=jax.ShapeDtypeStruct((N, Cout, R * Lpad), jnp.float32),
        grid_spec=pltpu.PrefetchScalarGridSpec(
            num_scalar_prefetch=0,
            grid=(N, R),
            in_specs=[
                pl.BlockSpec((None, None, Cin, SLAB), lambda n, r: (n, r, 0, 0)),
                pl.BlockSpec((Cout, K), lambda n, r: (0, 0)),
                pl.BlockSpec((Cout, 1), lambda n, r: (0, 0)),
            ],
            out_specs=pl.BlockSpec((None, Cout, Lpad), lambda n, r: (n, 0, r)),
            scratch_shapes=[pltpu.VMEM((K, Lpad), jnp.bfloat16)],
        ),
        compiler_params=pltpu.CompilerParams(
            dimension_semantics=("parallel", "parallel"),
            vmem_limit_bytes=vmem_limit,
        ),
    )(xs, wt, shift)

    # (N, Cout, R*Lpad) -> drop per-tile lane padding -> (N, Cout, H, Wp)
    # -> drop the 2p garbage columns per row.
    out = out_flat.reshape(N, Cout, R, Lpad)[:, :, :, :Ltile]
    out = out.reshape(N, Cout, H, Wp)[:, :, :, :W]
    return out


# -----------------------------------------------------------------------------
# Pure-JAX reference (for correctness) and parameter construction
# -----------------------------------------------------------------------------
def conv_norm_act_ref(x_nchw, params, dilation=1):
    w, b, gamma, beta, mean, var = params
    p = autopad(3, None, dilation)
    y = jax.lax.conv_general_dilated(
        x_nchw.astype(jnp.float32), w.astype(jnp.float32),
        window_strides=(1, 1), padding=((p, p), (p, p)),
        rhs_dilation=(dilation, dilation),
        dimension_numbers=("NCHW", "OIHW", "NCHW"),
        preferred_element_type=jnp.float32)
    y = y + b[None, :, None, None]
    y = (y - mean[None, :, None, None]) / jnp.sqrt(var[None, :, None, None] + 1e-5)
    y = gamma[None, :, None, None] * y + beta[None, :, None, None]
    return jnp.maximum(y, 0.0)


def init_cna_params(key, cin, cout):
    """Conv2d(3x3) + BatchNorm2d (eval-mode running stats) parameters."""
    k1, k2, k3, k4 = jax.random.split(key, 4)
    w = 0.1 * jax.random.normal(k1, (cout, cin, 3, 3), jnp.float32)
    b = 0.01 * jax.random.normal(k2, (cout,), jnp.float32)
    gamma = 1.0 + 0.1 * jax.random.normal(k3, (cout,), jnp.float32)
    beta = 0.01 * jax.random.normal(k4, (cout,), jnp.float32)
    mean = jnp.zeros((cout,), jnp.float32)
    var = jnp.ones((cout,), jnp.float32)
    return (w, b, gamma, beta, mean, var)


# -----------------------------------------------------------------------------
if __name__ == "__main__":
    key = jax.random.PRNGKey(0)
    kx, kp = jax.random.split(key)

    N, C_IN, C_OUT, H, W = 2, 4, 8, 16, 16
    x = jax.random.normal(kx, (N, C_IN, H, W), jnp.float32)
    params = init_cna_params(kp, C_IN, C_OUT)

    fwd = jax.jit(conv_norm_act, static_argnames=("dilation", "row_tile"))

    for dil in (1, 2):   # dilation=1 is the module default; 2 exercises autopad
        y = jax.block_until_ready(fwd(x, params, dilation=dil, row_tile=8))
        y_ref = conv_norm_act_ref(x, params, dilation=dil)
        assert y.shape == (N, C_OUT, H, W), y.shape
        assert bool(jnp.all(jnp.isfinite(y)))
        max_err = float(jnp.max(jnp.abs(y - y_ref)))
        assert max_err < 5e-2, f"dilation={dil} max_err={max_err}"

    print("KERNEL_OK")
</pallas_src>

<mosaic_0001>
module attributes {stable_mosaic.version = 11 : i64} {
  func.func @kernel(%arg0: i32, %arg1: i32, %arg2: memref<1x1x4x294xbf16, #tpu.memory_space<vmem>>, %arg3: memref<8x36xbf16, #tpu.memory_space<vmem>>, %arg4: memref<8x1xf32, #tpu.memory_space<vmem>>, %arg5: memref<1x8x256xf32, #tpu.memory_space<vmem>>, %arg6: memref<36x256xbf16, #tpu.memory_space<vmem>>) attributes {dimension_semantics = [#tpu.dimension_semantics<parallel>, #tpu.dimension_semantics<parallel>], iteration_bounds = array<i64: 2, 2>, scalar_prefetch = 0 : i64, scratch_operands = 1 : i64, tpu.core_type = #tpu.core_type<tc>, window_params = [{transform_indices = @transform_0, window_bounds = array<i64: 1, 1, 4, 294>}, {pipeline_mode = #tpu.pipeline_mode<synchronous>, transform_indices = @transform_1, window_bounds = array<i64: 8, 36>}, {pipeline_mode = #tpu.pipeline_mode<synchronous>, transform_indices = @transform_2, window_bounds = array<i64: 8, 1>}, {transform_indices = @transform_3, window_bounds = array<i64: 1, 8, 256>}]} {
    %c0 = arith.constant 0 : index
    %c0_0 = arith.constant 0 : index
    %c0_1 = arith.constant 0 : index
    %c0_2 = arith.constant 0 : index
    %0 = vector.load %arg2[%c0, %c0_0, %c0_1, %c0_2] : memref<1x1x4x294xbf16, #tpu.memory_space<vmem>>, vector<1x1x4x256xbf16>
    %1 = vector.shape_cast %0 : vector<1x1x4x256xbf16> to vector<4x256xbf16>
    %c0_3 = arith.constant 0 : index
    %c0_4 = arith.constant 0 : index
    %2 = vector.load %arg6[%c0_3, %c0_4] : memref<36x256xbf16, #tpu.memory_space<vmem>>, vector<4x256xbf16>
    tpu.vector_store %arg6[%c0_3, %c0_4], %1 {strides = array<i32>} : memref<36x256xbf16, #tpu.memory_space<vmem>>, vector<4x256xbf16>,
    %c0_5 = arith.constant 0 : index
    %c0_6 = arith.constant 0 : index
    %c0_7 = arith.constant 0 : index
    %c1 = arith.constant 1 : index
    %3 = vector.load %arg2[%c0_5, %c0_6, %c0_7, %c1] : memref<1x1x4x294xbf16, #tpu.memory_space<vmem>>, vector<1x1x4x256xbf16>
    %4 = vector.shape_cast %3 : vector<1x1x4x256xbf16> to vector<4x256xbf16>
    %c4 = arith.constant 4 : index
    %c0_8 = arith.constant 0 : index
    %5 = vector.load %arg6[%c4, %c0_8] : memref<36x256xbf16, #tpu.memory_space<vmem>>, vector<4x256xbf16>
    tpu.vector_store %arg6[%c4, %c0_8], %4 {strides = array<i32>} : memref<36x256xbf16, #tpu.memory_space<vmem>>, vector<4x256xbf16>,
    %c0_9 = arith.constant 0 : index
    %c0_10 = arith.constant 0 : index
    %c0_11 = arith.constant 0 : index
    %c2 = arith.constant 2 : index
    %6 = vector.load %arg2[%c0_9, %c0_10, %c0_11, %c2] : memref<1x1x4x294xbf16, #tpu.memory_space<vmem>>, vector<1x1x4x256xbf16>
    %7 = vector.shape_cast %6 : vector<1x1x4x256xbf16> to vector<4x256xbf16>
    %c8 = arith.constant 8 : index
    %c0_12 = arith.constant 0 : index
    %8 = vector.load %arg6[%c8, %c0_12] : memref<36x256xbf16, #tpu.memory_space<vmem>>, vector<4x256xbf16>
    tpu.vector_store %arg6[%c8, %c0_12], %7 {strides = array<i32>} : memref<36x256xbf16, #tpu.memory_space<vmem>>, vector<4x256xbf16>,
    %c0_13 = arith.constant 0 : index
    %c0_14 = arith.constant 0 : index
    %c0_15 = arith.constant 0 : index
    %c18 = arith.constant 18 : index
    %9 = vector.load %arg2[%c0_13, %c0_14, %c0_15, %c18] : memref<1x1x4x294xbf16, #tpu.memory_space<vmem>>, vector<1x1x4x256xbf16>
    %10 = vector.shape_cast %9 : vector<1x1x4x256xbf16> to vector<4x256xbf16>
    %c12 = arith.constant 12 : index
    %c0_16 = arith.constant 0 : index
    %11 = vector.load %arg6[%c12, %c0_16] : memref<36x256xbf16, #tpu.memory_space<vmem>>, vector<4x256xbf16>
    tpu.vector_store %arg6[%c12, %c0_16], %10 {strides = array<i32>} : memref<36x256xbf16, #tpu.memory_space<vmem>>, vector<4x256xbf16>,
    %c0_17 = arith.constant 0 : index
    %c0_18 = arith.constant 0 : index
    %c0_19 = arith.constant 0 : index
    %c19 = arith.constant 19 : index
    %12 = vector.load %arg2[%c0_17, %c0_18, %c0_19, %c19] : memref<1x1x4x294xbf16, #tpu.memory_space<vmem>>, vector<1x1x4x256xbf16>
    %13 = vector.shape_cast %12 : vector<1x1x4x256xbf16> to vector<4x256xbf16>
    %c16 = arith.constant 16 : index
    %c0_20 = arith.constant 0 : index
    %14 = vector.load %arg6[%c16, %c0_20] : memref<36x256xbf16, #tpu.memory_space<vmem>>, vector<4x256xbf16>
    tpu.vector_store %arg6[%c16, %c0_20], %13 {strides = array<i32>} : memref<36x256xbf16, #tpu.memory_space<vmem>>, vector<4x256xbf16>,
    %c0_21 = arith.constant 0 : index
    %c0_22 = arith.constant 0 : index
    %c0_23 = arith.constant 0 : index
    %c20 = arith.constant 20 : index
    %15 = vector.load %arg2[%c0_21, %c0_22, %c0_23, %c20] : memref<1x1x4x294xbf16, #tpu.memory_space<vmem>>, vector<1x1x4x256xbf16>
    %16 = vector.shape_cast %15 : vector<1x1x4x256xbf16> to vector<4x256xbf16>
    %c20_24 = arith.constant 20 : index
    %c0_25 = arith.constant 0 : index
    %17 = vector.load %arg6[%c20_24, %c0_25] : memref<36x256xbf16, #tpu.memory_space<vmem>>, vector<4x256xbf16>
    tpu.vector_store %arg6[%c20_24, %c0_25], %16 {strides = array<i32>} : memref<36x256xbf16, #tpu.memory_space<vmem>>, vector<4x256xbf16>,
    %c0_26 = arith.constant 0 : index
    %c0_27 = arith.constant 0 : index
    %c0_28 = arith.constant 0 : index
    %c36 = arith.constant 36 : index
    %18 = vector.load %arg2[%c0_26, %c0_27, %c0_28, %c36] : memref<1x1x4x294xbf16, #tpu.memory_space<vmem>>, vector<1x1x4x256xbf16>
    %19 = vector.shape_cast %18 : vector<1x1x4x256xbf16> to vector<4x256xbf16>
    %c24 = arith.constant 24 : index
    %c0_29 = arith.constant 0 : index
    %20 = vector.load %arg6[%c24, %c0_29] : memref<36x256xbf16, #tpu.memory_space<vmem>>, vector<4x256xbf16>
    tpu.vector_store %arg6[%c24, %c0_29], %19 {strides = array<i32>} : memref<36x256xbf16, #tpu.memory_space<vmem>>, vector<4x256xbf16>,
    %c0_30 = arith.constant 0 : index
    %c0_31 = arith.constant 0 : index
    %c0_32 = arith.constant 0 : index
    %c37 = arith.constant 37 : index
    %21 = vector.load %arg2[%c0_30, %c0_31, %c0_32, %c37] : memref<1x1x4x294xbf16, #tpu.memory_space<vmem>>, vector<1x1x4x256xbf16>
    %22 = vector.shape_cast %21 : vector<1x1x4x256xbf16> to vector<4x256xbf16>
    %c28 = arith.constant 28 : index
    %c0_33 = arith.constant 0 : index
    %23 = vector.load %arg6[%c28, %c0_33] : memref<36x256xbf16, #tpu.memory_space<vmem>>, vector<4x256xbf16>
    tpu.vector_store %arg6[%c28, %c0_33], %22 {strides = array<i32>} : memref<36x256xbf16, #tpu.memory_space<vmem>>, vector<4x256xbf16>,
    %c0_34 = arith.constant 0 : index
    %c0_35 = arith.constant 0 : index
    %c0_36 = arith.constant 0 : index
    %c38 = arith.constant 38 : index
    %24 = vector.load %arg2[%c0_34, %c0_35, %c0_36, %c38] : memref<1x1x4x294xbf16, #tpu.memory_space<vmem>>, vector<1x1x4x256xbf16>
    %25 = vector.shape_cast %24 : vector<1x1x4x256xbf16> to vector<4x256xbf16>
    %c32 = arith.constant 32 : index
    %c0_37 = arith.constant 0 : index
    %26 = vector.load %arg6[%c32, %c0_37] : memref<36x256xbf16, #tpu.memory_space<vmem>>, vector<4x256xbf16>
    tpu.vector_store %arg6[%c32, %c0_37], %25 {strides = array<i32>} : memref<36x256xbf16, #tpu.memory_space<vmem>>, vector<4x256xbf16>,
    %c0_38 = arith.constant 0 : index
    %c0_39 = arith.constant 0 : index
    %27 = vector.load %arg3[%c0_38, %c0_39] : memref<8x36xbf16, #tpu.memory_space<vmem>>, vector<8x36xbf16>
    %c0_40 = arith.constant 0 : index
    %c0_41 = arith.constant 0 : index
    %28 = vector.load %arg6[%c0_40, %c0_41] : memref<36x256xbf16, #tpu.memory_space<vmem>>, vector<36x256xbf16>
    %cst = arith.constant dense<0.000000e+00> : vector<8x256xf32>
    %29 = tpu.matmul %27, %28, %cst {dimension_numbers = #tpu.dot_dimension_numbers<[1], [0], [0], [1], [0, 0, 1, 1], [], []>} : vector<8x36xbf16>, vector<36x256xbf16>, vector<8x256xf32> -> vector<8x256xf32>
    %c0_42 = arith.constant 0 : index
    %c0_43 = arith.constant 0 : index
    %30 = vector.load %arg4[%c0_42, %c0_43] : memref<8x1xf32, #tpu.memory_space<vmem>>, vector<8x1xf32>
    %31 = vector.broadcast %30 : vector<8x1xf32> to vector<8x256xf32>
    %32 = arith.addf %29, %31 : vector<8x256xf32>
    %cst_44 = arith.constant 0.000000e+00 : f32
    %33 = vector.broadcast %cst_44 : f32 to vector<8x256xf32>
    %34 = arith.maximumf %32, %33 : vector<8x256xf32>
    %c0_45 = arith.constant 0 : index
    %c0_46 = arith.constant 0 : index
    %c0_47 = arith.constant 0 : index
    %35 = vector.load %arg5[%c0_45, %c0_46, %c0_47] : memref<1x8x256xf32, #tpu.memory_space<vmem>>, vector<1x8x256xf32>
    %36 = vector.shape_cast %35 : vector<1x8x256xf32> to vector<8x256xf32>
    %37 = vector.shape_cast %34 : vector<8x256xf32> to vector<1x8x256xf32>
    tpu.vector_store %arg5[%c0_45, %c0_46, %c0_47], %37 {strides = array<i32>} : memref<1x8x256xf32, #tpu.memory_space<vmem>>, vector<1x8x256xf32>,
    return
  }
  func.func @transform_0(%arg0: i32, %arg1: i32) -> (i32, i32, i32, i32) {
    %c0_i32 = arith.constant 0 : i32
    %c0_i32_0 = arith.constant 0 : i32
    %c0_i32_1 = arith.constant 0 : i32
    return %arg0, %arg1, %c0_i32, %c0_i32_0 : i32, i32, i32, i32
  }
  func.func @transform_1(%arg0: i32, %arg1: i32) -> (i32, i32) {
    %c0_i32 = arith.constant 0 : i32
    %c0_i32_0 = arith.constant 0 : i32
    %c0_i32_1 = arith.constant 0 : i32
    return %c0_i32, %c0_i32_0 : i32, i32
  }
  func.func @transform_2(%arg0: i32, %arg1: i32) -> (i32, i32) {
    %c0_i32 = arith.constant 0 : i32
    %c0_i32_0 = arith.constant 0 : i32
    %c0_i32_1 = arith.constant 0 : i32
    return %c0_i32, %c0_i32_0 : i32, i32
  }
  func.func @transform_3(%arg0: i32, %arg1: i32) -> (i32, i32, i32) {
    %c0_i32 = arith.constant 0 : i32
    %c0_i32_0 = arith.constant 0 : i32
    return %arg0, %c0_i32, %arg1 : i32, i32, i32
  }
}

</mosaic_0001>

<llo_original>
// kernel: conv_norm_act.1
$region0: #{conv_norm_act.1}
  #allocation0 [shape = 'u32[]', space=smem, size = 0x4, offset = 0x4, fixed_abs, tag = 'smem constant byte address 0x4 - core index']
  #allocation1 [shape = 'u32[144,128]{1,0:T(1,128)}', space=vmem, size = 0x12000, scoped, tag = 'internal scratch']
  #allocation2 [shape = 'bf16[36,256]{1,0:T(8,128)(2,1)}', space=vmem, size = 0x5000, scoped, tag = 'scratch operand']
  %s0 = inlined_call_operand.vmem [shape: bf16[2,2,4,294], index: 0, kind: input, shape index: {}]
  %s1 = inlined_call_operand.vmem [shape: bf16[8,36], index: 1, kind: input, shape index: {}]
  %s2 = inlined_call_operand.vmem [shape: f32[8,1], index: 2, kind: input, shape index: {}]
  %s3 = inlined_call_operand.vmem [shape: f32[2,8,512], index: 3, kind: output, shape index: {}]
  %s4 = sld [smem:[#allocation0]]
  $region45: #{conv_norm_act.1} parent=0
    _
  %s6 = ssub.s32 1, %s4
  %s7 = scalar_select 0, %s6, %s4
  loop: start=0, step=1, limit=6
  $region2: #{conv_norm_act.1} parent=0 // loop_pre_header
    _
  $region3: #{conv_norm_act.1} parent=0 // loop_header
    %s9 = sphi 0, %s13
    %p10 = scmp.ge.s32.totalorder %s9, 6
    %s16 = sphi 0, %s28
    %s17 = sphi 0, %s24
    %s18 = sphi 0, %s16
    %s19 = sphi 0, %s17
    %s20 = sphi 0, %s18
    %s21 = sphi 0, %s19
    %s33 = sphi 0, %s35
    %s36 = sphi 0, %s33
    %s37 = sphi 0, %s36
    %s53 = sphi 0, %s37
    %s57 = sphi 0, %s57
    %s59 = sphi 0, %s57
    %s60 = sphi 0, %s59
    %s74 = sphi 0, %s60
    %s78 = sphi 0, %s78
    %s80 = sphi 0, %s78
    %s81 = sphi 0, %s80
    %s95 = sphi 0, %s81
    %s103 = sphi 0, %s105
    %s106 = sphi 0, %s103
    %s107 = sphi 0, %s106
    %s123 = sphi 0, %s107
  $region4: #{conv_norm_act.1} parent=0 // loop_header_branch
    %12 = sbr.rel (%p10) target = $region8
  $region5: #{conv_norm_act.1} parent=0 // loop_body
    %s14 = ssub.s32 %s9, 1
    %s15 = ssub.s32 %s9, 2
    %s22 = sadd.s32 1, %s17
    %p23 = scmp.ge.s32.totalorder %s22, 2
    %s24 = scalar_select %p23, 0, %s22
    %s25 = sadd.s32 1, %s16
    %s26 = scalar_select %p23, %s25, %s16
    %p27 = scmp.ge.s32.totalorder %s26, 2
    %s28 = scalar_select %p27, 0, %s26
    %s29 = ssub.s32 %s16, %s28
    %s30 = ssub.s32 %s17, %s24
    %s31 = sor.u32 %s29, %s30
    %p32 = scmp.eq.s32.totalorder %s31, 0
    %s34 = sadd.s32 %s33, 1
    %s35 = scalar_select %p32, %s33, %s34
    %p38 = pneg %p32
    %p39 = scmp.eq.s32.totalorder %s9, 3
    %p40 = por %p38, %p39
    %p41 = scmp.ne.s32.totalorder %s33, %s36
    %p42 = scmp.eq.s32.totalorder %s9, 0
    %p43 = por %p41, %p42
    %p44 = scmp.ne.s32.totalorder %s33, %s36
    %p45 = scmp.eq.s32.totalorder %s14, 3
    %p46 = por %p44, %p45
    %p47 = scmp.ne.s32.totalorder %s36, %s37
    %p48 = scmp.eq.s32.totalorder %s14, 0
    %p49 = por %p47, %p48
    %p50 = scmp.ne.s32.totalorder %s36, %s37
    %p51 = scmp.eq.s32.totalorder %s15, 3
    %p52 = por %p50, %p51
    %p54 = scmp.ne.s32.totalorder %s37, %s53
    %p55 = scmp.eq.s32.totalorder %s15, 0
    %p56 = por %p54, %p55
    %s58 = sadd.s32 %s57, 1
    %p61 = scmp.eq.s32.totalorder %s9, 3
    %p62 = scmp.ne.s32.totalorder %s57, %s59
    %p63 = scmp.eq.s32.totalorder %s9, 0
    %p64 = por %p62, %p63
    %p65 = scmp.ne.s32.totalorder %s57, %s59
    %p66 = scmp.eq.s32.totalorder %s14, 3
    %p67 = por %p65, %p66
    %p68 = scmp.ne.s32.totalorder %s59, %s60
    %p69 = scmp.eq.s32.totalorder %s14, 0
    %p70 = por %p68, %p69
    %p71 = scmp.ne.s32.totalorder %s59, %s60
    %p72 = scmp.eq.s32.totalorder %s15, 3
    %p73 = por %p71, %p72
    %p75 = scmp.ne.s32.totalorder %s60, %s74
    %p76 = scmp.eq.s32.totalorder %s15, 0
    %p77 = por %p75, %p76
    %s79 = sadd.s32 %s78, 1
    %p82 = scmp.eq.s32.totalorder %s9, 3
    %p83 = scmp.ne.s32.totalorder %s78, %s80
    %p84 = scmp.eq.s32.totalorder %s9, 0
    %p85 = por %p83, %p84
    %p86 = scmp.ne.s32.totalorder %s78, %s80
    %p87 = scmp.eq.s32.totalorder %s14, 3
    %p88 = por %p86, %p87
    %p89 = scmp.ne.s32.totalorder %s80, %s81
    %p90 = scmp.eq.s32.totalorder %s14, 0
    %p91 = por %p89, %p90
    %p92 = scmp.ne.s32.totalorder %s80, %s81
    %p93 = scmp.eq.s32.totalorder %s15, 3
    %p94 = por %p92, %p93
    %p96 = scmp.ne.s32.totalorder %s81, %s95
    %p97 = scmp.eq.s32.totalorder %s15, 0
    %p98 = por %p96, %p97
    %s99 = ssub.s32 %s16, %s28
    %s100 = ssub.s32 %s17, %s24
    %s101 = sor.u32 %s99, %s100
    %p102 = scmp.eq.s32.totalorder %s101, 0
    %s104 = sadd.s32 %s103, 1
    %s105 = scalar_select %p102, %s103, %s104
    %p108 = pneg %p102
    %p109 = scmp.eq.s32.totalorder %s9, 3
    %p110 = por %p108, %p109
    %p111 = scmp.ne.s32.totalorder %s103, %s106
    %p112 = scmp.eq.s32.totalorder %s9, 0
    %p113 = por %p111, %p112
    %p114 = scmp.ne.s32.totalorder %s103, %s106
    %p115 = scmp.eq.s32.totalorder %s14, 3
    %p116 = por %p114, %p115
    %p117 = scmp.ne.s32.totalorder %s106, %s107
    %p118 = scmp.eq.s32.totalorder %s14, 0
    %p119 = por %p117, %p118
    %p120 = scmp.ne.s32.totalorder %s106, %s107
    %p121 = scmp.eq.s32.totalorder %s15, 3
    %p122 = por %p120, %p121
    %p124 = scmp.ne.s32.totalorder %s107, %s123
    %p125 = scmp.eq.s32.totalorder %s15, 0
    %p126 = por %p124, %p125
    %p127 = scmp.le.s32.totalorder 1, %s9
    %p128 = scmp.lt.s32.totalorder %s9, 5
    %p129 = pnand %p127, %p128
    %p130 = pneg %p129
    // Predicated region
    $region9: #{conv_norm_act.1} parent=5 // pred_check
      _
    $region10: #{conv_norm_act.1} parent=5 // pred_check_branch
      %132 = sbr.rel (%p129) target = $region12
    $region11: #{conv_norm_act.1} parent=5 // pred_region
      %s133 = ssub.s32 %s9, 1
      // Predicated region
      $region13: #{conv_norm_act.1} parent=11 // pred_check
        %p134 = pneg %p70
      $region14: #{conv_norm_act.1} parent=11 // pred_check_branch
        %136 = sbr.rel (%p134) target = $region16
      $region15: #{conv_norm_act.1} parent=11 // pred_region
        _
      $region16: #{conv_norm_act.1} parent=11 // pred_fallthru
        _
      // Predicated region
      $region17: #{conv_norm_act.1} parent=11 // pred_check
        %p137 = pneg %p91
      $region18: #{conv_norm_act.1} parent=11 // pred_check_branch
        %139 = sbr.rel (%p137) target = $region20
      $region19: #{conv_norm_act.1} parent=11 // pred_region
        _
      $region20: #{conv_norm_act.1} parent=11 // pred_fallthru
        _
    $region12: #{conv_norm_act.1} parent=5 // pred_fallthru
      _
    %p140 = scmp.lt.s32.totalorder %s9, 4
    // Predicated region
    $region21: #{conv_norm_act.1} parent=5 // pred_check
      %p141 = pneg %p140
    $region22: #{conv_norm_act.1} parent=5 // pred_check_branch
      %143 = sbr.rel (%p141) target = $region24
    $region23: #{conv_norm_act.1} parent=5 // pred_region
      // Predicated region
      $region25: #{conv_norm_act.1} parent=23 // pred_check
        %p144 = pneg %p43
      $region26: #{conv_norm_act.1} parent=23 // pred_check_branch
        %146 = sbr.rel (%p144) target = $region28
      $region27: #{conv_norm_act.1} parent=23 // pred_region
        %p147 = scmp.lt.s32.totalorder %s16, 1
        %s148 = scalar_select %p147, %s16, 1
        %p149 = scmp.lt.s32.totalorder %s17, 1
        %s150 = scalar_select %p149, %s17, 1
        %s151 = smul.addr %s150, 3
        %s152 = smul.addr %s148, 6
        %s153 = sadd.s32 %s151, %s152
        %s154 = smul.addr %s153, 2
        %s155 = scalar_lea.vmem %s0, %s154
      $region28: #{conv_norm_act.1} parent=23 // pred_fallthru
        _
    $region24: #{conv_norm_act.1} parent=5 // pred_fallthru
      _
    %p156 = scmp.le.s32.totalorder 1, %s9
    %p157 = scmp.lt.s32.totalorder %s9, 5
    %p158 = pnand %p156, %p157
    %p159 = pneg %p158
    // Predicated region
    $region29: #{conv_norm_act.1} parent=5 // pred_check
      _
    $region30: #{conv_norm_act.1} parent=5 // pred_check_branch
      %161 = sbr.rel (%p158) target = $region32
    $region31: #{conv_norm_act.1} parent=5 // pred_region
      %s162 = ssub.s32 %s9, 1
      %p163 = scmp.lt.s32.totalorder %s18, 1
      %s164 = scalar_select %p163, %s18, 1
      %p165 = scmp.lt.s32.totalorder %s19, 1
      %s166 = scalar_select %p165, %s19, 1
      %s167 = smul.addr %s166, 3
      %s168 = smul.addr %s164, 6
      %s169 = sadd.s32 %s167, %s168
      %s170 = smul.addr %s169, 2
      %s171 = scalar_lea.vmem %s0, %s170
      %p172 = pneg %p49
      %p173 = pneg %p46
      %p174 = pneg %p70
      %p175 = pneg %p67
      %p176 = pneg %p91
      %p177 = pneg %p88
      %p178 = pneg %p119
      %p179 = pneg %p116
      %s180 = smul.u32 2, %s19
      %p181 = scmp.lt.s32.totalorder %s18, 1
      %s182 = scalar_select %p181, %s18, 1
      %p183 = scmp.lt.s32.totalorder %s180, 3
      %s184 = scalar_select %p183, %s180, 3
      %s185 = smul.addr %s182, 4
      %s186 = sadd.s32 %s184, %s185
      %s187 = smul.addr %s186, 8
      %s188 = scalar_lea.vmem %s3, %s187
      %p189 = scmp.lt.s32.totalorder %s18, 1
      %s190 = scalar_select %p189, %s18, 1
      %p191 = scmp.lt.s32.totalorder %s19, 1
      %s192 = scalar_select %p191, %s19, 1
      %s193 = smul.addr %s192, 3
      %s194 = smul.addr %s190, 6
      %s195 = sadd.s32 %s193, %s194
      %s196 = smul.addr %s195, 2
      %s197 = scalar_lea.vmem %s0, %s196
      %s198 = smul.u32 2, %s19
      %p199 = scmp.lt.s32.totalorder %s18, 1
      %s200 = scalar_select %p199, %s18, 1
      %p201 = scmp.lt.s32.totalorder %s198, 3
      %s202 = scalar_select %p201, %s198, 3
      %s203 = smul.addr %s200, 4
      %s204 = sadd.s32 %s202, %s203
      %s205 = smul.addr %s204, 8
      %s206 = scalar_lea.vmem %s3, %s205
      %s207 = smul.u32 2, %s19
      %v209 = vld [vmem:[%s197] sm:$0xf]
      %v212 = vunpack.c.l.s4 1983009808
      %v213 = vunpack.c.0.s8 %v212
      %v214 = vlaneseq
      %v215 = vshrl.u32 %v214, 7
      %v216 = vsub.s32 %v213, %v215
      %v217 = vrot.slane %v209, %v216
      %219 = vst [vmem:[#allocation2] sm:$0x33] %v217
      %v220 = vld [vmem:[%s197] sm:$0x3f]
      %v222 = vcombine.low %v220, %v220
      %v224 = vunpack.c.l.s4 1983009808
      %v225 = vunpack.c.0.s8 %v224
      %v226 = vlaneseq
      %v227 = vshrl.u32 %v226, 7
      %v228 = vsub.s32 %v225, %v227
      %v229 = vrot.slane %v222, %v228
      %v231 = vunpack.c.l.s4 1983009808
      %v232 = vunpack.c.0.s8 %v231
      %v233 = vlaneseq
      %v234 = vshrl.u32 %v233, 7
      %v235 = vsub.s32 %v232, %v234
      %v236 = vrot.slane %v220, %v235
      %237 = vrot.lane.b32.xlu0 %v229, 127
      %v238 = vpop.permute.xlu0 %237
      %239 = vrot.lane.b32.xlu0 %v236, 127
      %v240 = vpop.permute.xlu0 %239
      %v241 = vrot.slane %v238, 4
      %v242 = vrot.slane %v240, 4
      %vm243 = vcmask 1043456
      %v244 = vsel %vm243, %v241, %v242
      %vm245 = vcmask 1039360
      %v246 = vsel %vm245, %v238, %v244
      %248 = vst [vmem:[#allocation2] sm:$0xcc] %v246
      %v249 = vld [vmem:[%s197] sm:$0x3f]
      %v251 = vcombine.high %v249, %v249
      %v253 = vunpack.c.l.s4 1983009808
      %v254 = vunpack.c.0.s8 %v253
      %v255 = vlaneseq
      %v256 = vshrl.u32 %v255, 7
      %v257 = vsub.s32 %v254, %v256
      %v258 = vrot.slane %v249, %v257
      %v260 = vunpack.c.l.s4 1983009808
      %v261 = vunpack.c.0.s8 %v260
      %v262 = vlaneseq
      %v263 = vshrl.u32 %v262, 7
      %v264 = vsub.s32 %v261, %v263
      %v265 = vrot.slane %v251, %v264
      %266 = vrot.lane.b32.xlu0 %v258, 126
      %v267 = vpop.permute.xlu0 %266
      %268 = vrot.lane.b32.xlu0 %v265, 126
      %v269 = vpop.permute.xlu0 %268
      %v270 = vrot.slane %v267, 4
      %v271 = vrot.slane %v269, 4
      %v272 = vsel %vm243, %v270, %v271
      %vm273 = vcmask 1031168
      %v274 = vsel %vm273, %v267, %v272
      %276 = vst [vmem:[#allocation2 + $0x8] sm:$0x33] %v274
      %v277 = vld [vmem:[%s197] sm:$0x3f]
      %v279 = vcombine.low %v277, %v277
      %v281 = vunpack.c.l.s4 1983009808
      %v282 = vunpack.c.0.s8 %v281
      %v283 = vlaneseq
      %v284 = vshrl.u32 %v283, 7
      %v285 = vsub.s32 %v282, %v284
      %v286 = vrot.slane %v279, %v285
      %v288 = vunpack.c.l.s4 1983009808
      %v289 = vunpack.c.0.s8 %v288
      %v290 = vlaneseq
      %v291 = vshrl.u32 %v290, 7
      %v292 = vsub.s32 %v289, %v291
      %v293 = vrot.slane %v277, %v292
      %294 = vrot.lane.b32.xlu0 %v286, 110
      %v295 = vpop.permute.xlu0 %294
      %296 = vrot.lane.b32.xlu0 %v293, 110
      %v297 = vpop.permute.xlu0 %296
      %v298 = vrot.slane %v295, 4
      %v299 = vrot.slane %v297, 4
      %v300 = vsel %vm243, %v298, %v299
      %vm301 = vcmask 900096
      %v302 = vsel %vm301, %v295, %v300
      %304 = vst [vmem:[#allocation2 + $0x8] sm:$0xcc] %v302
      %v305 = vld [vmem:[%s197] sm:$0x3f]
      %v307 = vcombine.high %v305, %v305
      %v309 = vunpack.c.l.s4 1983009808
      %v310 = vunpack.c.0.s8 %v309
      %v311 = vlaneseq
      %v312 = vshrl.u32 %v311, 7
      %v313 = vsub.s32 %v310, %v312
      %v314 = vrot.slane %v305, %v313
      %v316 = vunpack.c.l.s4 1983009808
      %v317 = vunpack.c.0.s8 %v316
      %v318 = vlaneseq
      %v319 = vshrl.u32 %v318, 7
      %v320 = vsub.s32 %v317, %v319
      %v321 = vrot.slane %v307, %v320
      %322 = vrot.lane.b32.xlu0 %v314, 109
      %v323 = vpop.permute.xlu0 %322
      %324 = vrot.lane.b32.xlu0 %v321, 109
      %v325 = vpop.permute.xlu0 %324
      %v326 = vrot.slane %v323, 4
      %v327 = vrot.slane %v325, 4
      %v328 = vsel %vm243, %v326, %v327
      %vm329 = vcmask 891904
      %v330 = vsel %vm329, %v323, %v328
      %332 = vst [vmem:[#allocation2 + $0x10] sm:$0x33] %v330
      %v333 = vld [vmem:[%s197] sm:$0x3f]
      %v335 = vcombine.low %v333, %v333
      %v337 = vunpack.c.l.s4 1983009808
      %v338 = vunpack.c.0.s8 %v337
      %v339 = vlaneseq
      %v340 = vshrl.u32 %v339, 7
      %v341 = vsub.s32 %v338, %v340
      %v342 = vrot.slane %v335, %v341
      %v344 = vunpack.c.l.s4 1983009808
      %v345 = vunpack.c.0.s8 %v344
      %v346 = vlaneseq
      %v347 = vshrl.u32 %v346, 7
      %v348 = vsub.s32 %v345, %v347
      %v349 = vrot.slane %v333, %v348
      %350 = vrot.lane.b32.xlu0 %v342, 108
      %v351 = vpop.permute.xlu0 %350
      %352 = vrot.lane.b32.xlu0 %v349, 108
      %v353 = vpop.permute.xlu0 %352
      %v354 = vrot.slane %v351, 4
      %v355 = vrot.slane %v353, 4
      %v356 = vsel %vm243, %v354, %v355
      %vm357 = vcmask 883712
      %v358 = vsel %vm357, %v351, %v356
      %360 = vst [vmem:[#allocation2 + $0x10] sm:$0xcc] %v358
      %v361 = vld [vmem:[%s197] sm:$0x3f]
      %v363 = vcombine.high %v361, %v361
      %v365 = vunpack.c.l.s4 1983009808
      %v366 = vunpack.c.0.s8 %v365
      %v367 = vlaneseq
      %v368 = vshrl.u32 %v367, 7
      %v369 = vsub.s32 %v366, %v368
      %v370 = vrot.slane %v361, %v369
      %v372 = vunpack.c.l.s4 1983009808
      %v373 = vunpack.c.0.s8 %v372
      %v374 = vlaneseq
      %v375 = vshrl.u32 %v374, 7
      %v376 = vsub.s32 %v373, %v375
      %v377 = vrot.slane %v363, %v376
      %378 = vrot.lane.b32.xlu0 %v370, 92
      %v379 = vpop.permute.xlu0 %378
      %380 = vrot.lane.b32.xlu0 %v377, 92
      %v381 = vpop.permute.xlu0 %380
      %v382 = vrot.slane %v379, 4
      %v383 = vrot.slane %v381, 4
      %v384 = vsel %vm243, %v382, %v383
      %vm385 = vcmask 752640
      %v386 = vsel %vm385, %v379, %v384
      %388 = vst [vmem:[#allocation2 + $0x18] sm:$0x33] %v386
      %v389 = vld [vmem:[%s197] sm:$0x3f]
      %v391 = vcombine.low %v389, %v389
      %v393 = vunpack.c.l.s4 1983009808
      %v394 = vunpack.c.0.s8 %v393
      %v395 = vlaneseq
      %v396 = vshrl.u32 %v395, 7
      %v397 = vsub.s32 %v394, %v396
      %v398 = vrot.slane %v391, %v397
      %v400 = vunpack.c.l.s4 1983009808
      %v401 = vunpack.c.0.s8 %v400
      %v402 = vlaneseq
      %v403 = vshrl.u32 %v402, 7
      %v404 = vsub.s32 %v401, %v403
      %v405 = vrot.slane %v389, %v404
      %406 = vrot.lane.b32.xlu0 %v398, 91
      %v407 = vpop.permute.xlu0 %406
      %408 = vrot.lane.b32.xlu0 %v405, 91
      %v409 = vpop.permute.xlu0 %408
      %v410 = vrot.slane %v407, 4
      %v411 = vrot.slane %v409, 4
      %v412 = vsel %vm243, %v410, %v411
      %vm413 = vcmask 744448
      %v414 = vsel %vm413, %v407, %v412
      %416 = vst [vmem:[#allocation2 + $0x18] sm:$0xcc] %v414
      %v417 = vld [vmem:[%s197] sm:$0x3f]
      %v419 = vcombine.high %v417, %v417
      %v421 = vunpack.c.l.s4 1983009808
      %v422 = vunpack.c.0.s8 %v421
      %v423 = vlaneseq
      %v424 = vshrl.u32 %v423, 7
      %v425 = vsub.s32 %v422, %v424
      %v426 = vrot.slane %v417, %v425
      %v428 = vunpack.c.l.s4 1983009808
      %v429 = vunpack.c.0.s8 %v428
      %v430 = vlaneseq
      %v431 = vshrl.u32 %v430, 7
      %v432 = vsub.s32 %v429, %v431
      %v433 = vrot.slane %v419, %v432
      %434 = vrot.lane.b32.xlu0 %v426, 90
      %v435 = vpop.permute.xlu0 %434
      %436 = vrot.lane.b32.xlu0 %v433, 90
      %v437 = vpop.permute.xlu0 %436
      %v438 = vrot.slane %v435, 4
      %v439 = vrot.slane %v437, 4
      %v440 = vsel %vm243, %v438, %v439
      %vm441 = vcmask 736256
      %v442 = vsel %vm441, %v435, %v440
      %444 = vst [vmem:[#allocation2 + $0x20] sm:$0x33] %v442
      %v445 = vld [vmem:[%s1] sm:$0xf]
      %v446 = vld [vmem:[#allocation2] sm:$0xff]
      %v447 = vld [vmem:[#allocation2 + $0x8] sm:$0xff]
      %v448 = vld [vmem:[#allocation2 + $0x10] sm:$0xff]
      %v449 = vld [vmem:[#allocation2 + $0x18] sm:$0xff]
      %v450 = vld [vmem:[#allocation2 + $0x20] sm:$0x33]
      %v451 = vld [vmem:[%s2] sm:$0xff]
      %453 = vset.pattern.permute.xlu0 0
      %454 = vperm.xlu0 %453, %v451
      %v455 = vpop.permute.xlu0 %454
      %v462 = vunpack.c.l.b16 %v446
      %v463 = vunpack.c.h.b16 %v446
      %v464 = vunpack.c.l.b16 %v447
      %v465 = vunpack.c.h.b16 %v447
      %v466 = vunpack.c.l.b16 %v448
      %v467 = vunpack.c.h.b16 %v448
      %v468 = vunpack.c.l.b16 %v449
      %v469 = vunpack.c.h.b16 %v449
      %v470 = vunpack.c.l.b16 %v450
      %v471 = vunpack.c.h.b16 %v450
      %v472 = vpack.c.b16 %v464, %v462
      %v473 = vpack.c.b16 %v465, %v463
      %v474 = vpack.c.b16 %v468, %v466
      %v475 = vpack.c.b16 %v469, %v467
      %v476 = vpack.c.b16 %v470, %v470
      %v477 = vpack.c.b16 %v471, %v471
      %vm482 = vcmask 293888
      %v484 = vsel %vm482, %v445, 0
      %vm486 = vcmask 1041408
      %v488 = vsel %vm486, %v476, 0
      %v491 = vsel %vm486, %v477, 0
      %493 = vmatprep.subr.bf16.mxu0 %v473
      %494 = vmatpush1.bf16.msra.mxu0 %v472
      %495 = vmatprep.subr.bf16.mxu0 %v475
      %496 = vmatpush1.bf16.msra.mxu0 %v474
      %497 = vmatprep.subr.bf16.mxu0 %v491
      %498 = vmatpush1.bf16.msra.mxu0 %v488
      %499 = vmatprep.subr.bf16.mxu0 0
      %500 = vmatpush1.bf16.msra.mxu0 0
      %501 = vmatprep.subr.bf16.mxu0 0
      %502 = vmatpush1.bf16.msra.mxu0 0
      %503 = vmatprep.subr.bf16.mxu0 0
      %504 = vmatpush1.bf16.msra.mxu0 0
      %505 = vmatprep.subr.bf16.mxu0 0
      %506 = vmatpush1.bf16.msra.mxu0 0
      %507 = vmatprep.subr.bf16.mxu0 0
      %508 = vmatpush1.bf16.msra.mxu0 0
      %509 = vmatprep.subr.bf16.mxu0 0
      %510 = vmatpush1.bf16.msra.mxu0 0
      %511 = vmatprep.subr.bf16.mxu0 0
      %512 = vmatpush1.bf16.msra.mxu0 0
      %513 = vmatprep.subr.bf16.mxu0 0
      %514 = vmatpush1.bf16.msra.mxu0 0
      %515 = vmatprep.subr.bf16.mxu0 0
      %516 = vmatpush1.bf16.msra.mxu0 0
      %517 = vmatprep.subr.bf16.mxu0 0
      %518 = vmatpush1.bf16.msra.mxu0 0
      %519 = vmatprep.subr.bf16.mxu0 0
      %520 = vmatpush1.bf16.msra.mxu0 0
      %521 = vmatprep.subr.bf16.mxu0 0
      %522 = vmatpush1.bf16.msra.mxu0 0
      %523 = vmatprep.subr.bf16.mxu0 0
      %524 = vmatpush1.bf16.msra.mxu0 0
      %525 = vmatprep.mubr.bf16.mxu0 0
      %526 = vmatmul.mubr.bf16.gmra.mrb[0].mxu0 %v484
      %v527 = vpop.f32.mrb[0].mxu0
      %v528 = vadd.f32 %v455, %v527
      %v529 = vpop.f32.mrb[0].mxu0
      %v530 = vadd.f32 %v455, %v529
      %v531 = vpop.f32.mrb[0].mxu0
      %v532 = vpop.f32.mrb[0].mxu0
      %533 = vdwg.mxu0
      %v534 = vmax.f32 %v528, 0.0
      %v535 = vmax.f32 %v530, 0.0
      %536 = vst [vmem:[%s206] sm:$0xff] %v534
      %537 = vst [vmem:[%s206 + $0x8] sm:$0xff] %v535
      %s538 = smul.u32 2, %s19
      %p539 = scmp.lt.s32.totalorder %s18, 1
      %s540 = scalar_select %p539, %s18, 1
      %p541 = scmp.lt.s32.totalorder %s538, 3
      %s542 = scalar_select %p541, %s538, 3
      %s543 = smul.addr %s540, 4
      %s544 = sadd.s32 %s542, %s543
      %s545 = smul.addr %s544, 8
      %s546 = scalar_lea.vmem %s3, %s545
      // Predicated region
      $region33: #{conv_norm_act.1} parent=31 // pred_check
        %p547 = pneg %p116
      $region34: #{conv_norm_act.1} parent=31 // pred_check_branch
        %549 = sbr.rel (%p547) target = $region36
      $region35: #{conv_norm_act.1} parent=31 // pred_region
        %s550 = smul.u32 2, %s19
      $region36: #{conv_norm_act.1} parent=31 // pred_fallthru
        _
    $region32: #{conv_norm_act.1} parent=5 // pred_fallthru
      _
    %p551 = scmp.le.s32.totalorder 2, %s9
    // Predicated region
    $region37: #{conv_norm_act.1} parent=5 // pred_check
      %p552 = pneg %p551
    $region38: #{conv_norm_act.1} parent=5 // pred_check_branch
      %554 = sbr.rel (%p552) target = $region40
    $region39: #{conv_norm_act.1} parent=5 // pred_region
      %s555 = ssub.s32 %s9, 2
      // Predicated region
      $region41: #{conv_norm_act.1} parent=39 // pred_check
        %p556 = pneg %p122
      $region42: #{conv_norm_act.1} parent=39 // pred_check_branch
        %558 = sbr.rel (%p556) target = $region44
      $region43: #{conv_norm_act.1} parent=39 // pred_region
        %s559 = smul.u32 2, %s21
        %p560 = scmp.lt.s32.totalorder %s20, 1
        %s561 = scalar_select %p560, %s20, 1
        %p562 = scmp.lt.s32.totalorder %s559, 3
        %s563 = scalar_select %p562, %s559, 3
        %s564 = smul.addr %s561, 4
        %s565 = sadd.s32 %s563, %s564
        %s566 = smul.addr %s565, 8
        %s567 = scalar_lea.vmem %s3, %s566
      $region44: #{conv_norm_act.1} parent=39 // pred_fallthru
        _
    $region40: #{conv_norm_act.1} parent=5 // pred_fallthru
      _
  $region6: #{conv_norm_act.1} parent=0 // loop_footer
    %s13 = sadd.s32 1, %s9
  $region7: #{conv_norm_act.1} parent=0 // loop_footer_branch
    %8 = sbr.rel target = $region3
  $region8: #{conv_norm_act.1} parent=0 // loop_exit
    _

</llo_original>
